<compile_context>
chip_gen: v6e
topology: v6e:2x2x1
jax: 0.10.0
libtpu: 0.0.40
codegen_flags: <defaults>
</compile_context>

<pallas_src>
import functools

import jax
import jax.numpy as jnp
from jax.experimental import pallas as pl
from jax.experimental.pallas import tpu as pltpu


_TARGET_STEP_BYTES = 2 << 20   # ~2 MB of streamed HBM bytes per grid step
_MAX_TILE_N = 32768            # upper cap (v7x benefits from the largest tiles)
_TILE_ALIGN = 512


def _choose_tiling(num_train, bit, n_class, num_cores=1):
    """Pick (tile_n, num_train_pad).

    tile_n targets ~_TARGET_STEP_BYTES of streamed bytes per step
    ((bit+n_class) bf16 per column + one f32 norm), is a multiple of 128
    lanes, and num_train_pad is a multiple of num_cores*tile_n so the grid
    never needs a fallback path.
    """
    row_bytes = (bit + n_class) * 2 + 4
    t = (_TARGET_STEP_BYTES // row_bytes) // _TILE_ALIGN * _TILE_ALIGN
    t = int(max(_TILE_ALIGN, min(t, _MAX_TILE_N)))
    pad128 = -(-num_train // 128) * 128
    if pad128 <= t:
        return pad128, pad128            # whole (lane-padded) buffer, one tile
    chunk = t * max(1, int(num_cores))
    num_train_pad = -(-num_train // chunk) * chunk
    return t, num_train_pad


def init_idhn_state(num_train, bit, n_class, num_cores=1):
    """Allocate the persistent (donated) buffers.

      D     : (bit+n_class, num_train_pad) bf16 -- rows [0:bit] = U^T (codes),
              rows [bit:] = Y^T (labels), feature-first for lane-dense DMA.
      cnorm : (1, num_train_pad) f32 -- per-column label norms sqrt(sum y^2).
    """
    _, num_train_pad = _choose_tiling(num_train, bit, n_class, num_cores)
    D = jnp.zeros((bit + n_class, num_train_pad), jnp.bfloat16)
    cnorm = jnp.zeros((1, num_train_pad), jnp.float32)
    return D, cnorm


def _idhn_kernel(lhs_ref, ynorm_ref, D_ref, cnorm_ref, out_ref, acc_ref, *,
                 gamma1, q, batch, tile_n, tiles_per_core, num_train, masked):
    j = pl.program_id(1)

    @pl.when(j == 0)
    def _():
        acc_ref[...] = jnp.zeros_like(acc_ref)

    # Single fused MXU pass: block-diag LHS [[alpha1*u_n, 0], [0, y]] against
    # the fused tile [[U^T], [Y^T]] -> (2B, TN) f32:
    #   rows [0:B)  = alpha1 * u_n @ U^T   (inner products)
    #   rows [B:2B) = y @ Y^T              (label-similarity numerator)
    prod = jnp.dot(lhs_ref[...], D_ref[...], preferred_element_type=jnp.float32)
    ip = prod[:batch]
    s_num = prod[batch:]

    # Cosine similarity.  Exact f32 divide keeps the 0.99 / 0.01 M thresholds
    # identical to the reference; at small batch the kernel is HBM-bound so
    # the VALU divide is free (switch to pl.reciprocal only if batch >= 64).
    norm = ynorm_ref[...] * cnorm_ref[...]          # (B,1)*(1,TN) VPU broadcast
    s = s_num / (norm + 1e-5)

    M = (s > 0.99).astype(jnp.float32) + (s < 0.01).astype(jnp.float32)

    log_loss = jnp.log1p(jnp.exp(-jnp.abs(ip))) + jnp.maximum(ip, 0.0) - s * ip
    mse_loss = (ip + q - 2.0 * q * s) ** 2
    tile_loss = M * log_loss + gamma1 * (1.0 - M) * mse_loss

    if masked:
        # Zero out padded columns (otherwise each contributes log(2)).
        tile_idx = pl.program_id(0) * tiles_per_core + j
        col = tile_idx * tile_n + jax.lax.broadcasted_iota(
            jnp.int32, (1, tile_n), 1)
        tile_loss = jnp.where(col < num_train, tile_loss, 0.0)

    # Lane-reduce the tile (XLU) into a tiny (B,1) accumulator so scratch is
    # independent of tile_n (keeps big tiles inside v7x's 64 MiB VMEM).
    acc_ref[...] += jnp.sum(tile_loss, axis=-1, keepdims=True)

    @pl.when(j == pl.num_programs(1) - 1)
    def _():
        out_ref[...] = jnp.reshape(jnp.sum(acc_ref[...]), (1, 1, 1))


@functools.partial(
    jax.jit,
    static_argnames=("alpha1", "gamma1", "lambda1", "num_train", "num_cores"),
    donate_argnums=(3, 4))
def _idhn_forward(u, y, ind, D, cnorm, *, alpha1, gamma1, lambda1,
                  num_train, num_cores):
    u = u.astype(jnp.float32)
    y = y.astype(jnp.float32)
    batch, bit = u.shape
    feat, num_train_pad = D.shape
    n_class = feat - bit
    q = float(bit)

    # --- elementwise normalization + in-place (donated) buffer updates ---
    u_norm = u / (jnp.abs(u) + 1.0)
    # NOTE: lane-minor scatter = B single-column HBM writes; negligible next
    # to streaming num_train columns at moderate batch sizes.
    D = D.at[:, ind].set(jnp.concatenate([u_norm, y], axis=1).astype(D.dtype).T)
    y_norm = jnp.sqrt(jnp.sum(y * y, axis=1, keepdims=True))         # (B,1) f32
    cnorm = cnorm.at[0, ind].set(y_norm[:, 0])

    # Tiny block-diagonal LHS (alpha1 folded once, labels exact in bf16).
    lhs = jnp.concatenate(
        [jnp.concatenate([alpha1 * u_norm,
                          jnp.zeros((batch, n_class), jnp.float32)], axis=1),
         jnp.concatenate([jnp.zeros((batch, bit), jnp.float32), y], axis=1)],
        axis=0).astype(jnp.bfloat16)                                 # (2B, feat)

    # --- static tiling (must match init_idhn_state) ---
    tile_n, expected_pad = _choose_tiling(num_train, bit, n_class, num_cores)
    assert expected_pad == num_train_pad, (
        "persistent buffers must be allocated with init_idhn_state")
    # Keep per-step f32 elementwise temporaries comfortably in VMEM when batch
    # grows; halving keeps tile_n a divisor of num_train_pad.
    while batch * tile_n * 4 * 10 > (20 << 20) and tile_n % 256 == 0:
        tile_n //= 2
    num_tiles = num_train_pad // tile_n
    ncores = num_cores if (num_cores > 1 and num_tiles % num_cores == 0) else 1
    tiles_per_core = num_tiles // ncores
    masked = num_train_pad != num_train

    kernel = functools.partial(
        _idhn_kernel, gamma1=float(gamma1), q=q, batch=batch, tile_n=tile_n,
        tiles_per_core=tiles_per_core, num_train=num_train, masked=masked)

    # Per-step streamed bytes: one fused bf16 tile + one f32 norm tile.
    step_bytes = tile_n * (feat * 2 + 4)
    vmem_est = 3 * step_bytes + 14 * (2 * batch) * tile_n * 4 + (2 << 20)
    vmem_limit = int(min(vmem_est, 48 << 20)) if vmem_est > (16 << 20) else None

    # CORE_PARALLEL makes the 2-TC split real on v7x; default num_cores=1 is
    # plain sequential reduction on single-TC chips (v5e / v6e).
    lead_sem = pltpu.CORE_PARALLEL if ncores > 1 else "arbitrary"

    partials = pl.pallas_call(
        kernel,
        out_shape=jax.ShapeDtypeStruct((ncores, 1, 1), jnp.float32),
        grid_spec=pltpu.PrefetchScalarGridSpec(
            num_scalar_prefetch=0,
            grid=(ncores, tiles_per_core),
            in_specs=[
                pl.BlockSpec((2 * batch, feat), lambda c, j: (0, 0)),   # lhs
                pl.BlockSpec((batch, 1), lambda c, j: (0, 0)),          # |y| rows
                pl.BlockSpec((feat, tile_n),                            # fused U^T/Y^T
                             lambda c, j: (0, c * tiles_per_core + j)),
                pl.BlockSpec((1, tile_n),                               # column norms
                             lambda c, j: (0, c * tiles_per_core + j)),
            ],
            out_specs=pl.BlockSpec((1, 1, 1), lambda c, j: (c, 0, 0)),
            scratch_shapes=[pltpu.VMEM((batch, 1), jnp.float32)],
        ),
        compiler_params=pltpu.CompilerParams(
            dimension_semantics=(lead_sem, "arbitrary"),
            vmem_limit_bytes=vmem_limit),
        cost_estimate=pl.CostEstimate(
            flops=int(2 * (2 * batch) * feat * num_train_pad),
            transcendentals=int(batch * num_train_pad),
            bytes_accessed=int(num_train_pad * (feat * 2 + 4))),
    )(lhs, y_norm, D, cnorm)

    loss1 = jnp.sum(partials) / (batch * num_train)
    loss2 = lambda1 * jnp.mean(jnp.abs(jnp.abs(u_norm) - 1.0))
    return loss1 + loss2, D, cnorm


def idhn_loss_pallas(u, y, ind, D, cnorm, config, *, num_cores=1):
    """Returns (loss_scalar, updated_D, updated_cnorm).

    D / cnorm are the padded persistent buffers from init_idhn_state; they are
    DONATED and must not be reused by the caller after this call.
    Set num_cores=2 on v7x to shard the reduction across both TensorCores.
    """
    return _idhn_forward(u, y, ind, D, cnorm,
                         alpha1=float(config["alpha1"]),
                         gamma1=float(config["gamma1"]),
                         lambda1=float(config["lambda1"]),
                         num_train=int(config["num_train"]),
                         num_cores=int(num_cores))


def idhn_loss_ref(u, y, ind, U, Y, config):
    """Pure-jnp f32 reference mirroring the PyTorch forward (row-major U/Y)."""
    hi = jax.lax.Precision.HIGHEST
    u = u.astype(jnp.float32)
    y = y.astype(jnp.float32)
    q = float(u.shape[1])
    u_n = u / (jnp.abs(u) + 1.0)
    U = U.at[ind, :].set(u_n)
    Y = Y.at[ind, :].set(y)
    s = jnp.dot(y, Y.T, precision=hi)
    norm = (jnp.sqrt(jnp.sum(y ** 2, axis=1, keepdims=True))
            * jnp.sqrt(jnp.sum(Y ** 2, axis=1, keepdims=True)).T)
    s = s / (norm + 1e-5)
    M = (s > 0.99).astype(jnp.float32) + (s < 0.01).astype(jnp.float32)
    ip = config["alpha1"] * jnp.dot(u_n, U.T, precision=hi)
    log_loss = jnp.log(1.0 + jnp.exp(-jnp.abs(ip))) + jnp.maximum(ip, 0.0) - s * ip
    mse_loss = (ip + q - 2.0 * s * q) ** 2
    loss1 = jnp.mean(M * log_loss + config["gamma1"] * (1.0 - M) * mse_loss)
    loss2 = config["lambda1"] * jnp.mean(jnp.abs(jnp.abs(u_n) - 1.0))
    return loss1 + loss2


if __name__ == "__main__":
    config = {
        "num_train": 64,
        "n_class": 16,
        "alpha1": 0.5,
        "gamma1": 0.1,
        "lambda1": 0.1,
        "GPU": False,
    }
    bit = 32
    batch = 8
    num_train, n_class = config["num_train"], config["n_class"]

    key = jax.random.PRNGKey(0)
    ku, ky, kU, kY = jax.random.split(key, 4)

    u = jax.random.normal(ku, (batch, bit), dtype=jnp.float32)
    # Binary multi-label targets; every row has >= 1 positive label.
    y = (jax.random.uniform(ky, (batch, n_class)) > 0.7).astype(jnp.float32)
    y = y.at[:, 0].set(1.0)
    ind = jnp.arange(batch, dtype=jnp.int32) * 3   # distinct database rows

    # Persistent fused buffer + column norms (padded to the tile size).
    D0, cnorm0 = init_idhn_state(num_train, bit, n_class)
    # Pre-fill half the database so the non-updated part is exercised.
    U_pre = jnp.tanh(jax.random.normal(kU, (num_train // 2, bit))).astype(jnp.bfloat16)
    Y_pre = (jax.random.uniform(kY, (num_train // 2, n_class)) > 0.7).astype(jnp.bfloat16)
    D0 = D0.at[:bit, : num_train // 2].set(U_pre.T)
    D0 = D0.at[bit:, : num_train // 2].set(Y_pre.T)
    cnorm0 = cnorm0.at[0, : num_train // 2].set(
        jnp.sqrt(jnp.sum(Y_pre.astype(jnp.float32) ** 2, axis=1)))

    # f32 row-major copies for the reference — taken BEFORE the donating call
    # invalidates D0 / cnorm0 (drop padded columns).
    U0_ref = D0[:bit, :num_train].T.astype(jnp.float32)
    Y0_ref = D0[bit:, :num_train].T.astype(jnp.float32)
    loss_ref = jax.block_until_ready(idhn_loss_ref(u, y, ind, U0_ref, Y0_ref, config))

    loss, D1, cnorm1 = idhn_loss_pallas(u, y, ind, D0, cnorm0, config)
    loss = jax.block_until_ready(loss)

    # bf16 storage of the streamed code buffer perturbs ip by ~0.5%; s / M are
    # exact (binary labels, f32 norms), so a mildly loosened tolerance vs the
    # f32 reference is expected.
    assert jnp.allclose(loss, loss_ref, rtol=2e-2, atol=1e-3), (loss, loss_ref)

    print("KERNEL_OK")
</pallas_src>

<mosaic_0001>
module attributes {stable_mosaic.version = 11 : i64} {
  func.func @_idhn_kernel(%arg0: i32, %arg1: i32, %arg2: memref<16x48xbf16, #tpu.memory_space<vmem>>, %arg3: memref<8x1xf32, #tpu.memory_space<vmem>>, %arg4: memref<48x128xbf16, #tpu.memory_space<vmem>>, %arg5: memref<1x128xf32, #tpu.memory_space<vmem>>, %arg6: memref<1x1x1xf32, #tpu.memory_space<vmem>>, %arg7: memref<8x1xf32, #tpu.memory_space<vmem>>) attributes {dimension_semantics = [#tpu.dimension_semantics<arbitrary>, #tpu.dimension_semantics<arbitrary>], iteration_bounds = array<i64: 1, 1>, scalar_prefetch = 0 : i64, scratch_operands = 1 : i64, tpu.core_type = #tpu.core_type<tc>, window_params = [{pipeline_mode = #tpu.pipeline_mode<synchronous>, transform_indices = @transform_0, window_bounds = array<i64: 16, 48>}, {pipeline_mode = #tpu.pipeline_mode<synchronous>, transform_indices = @transform_1, window_bounds = array<i64: 8, 1>}, {transform_indices = @transform_2, window_bounds = array<i64: 48, 128>}, {transform_indices = @transform_3, window_bounds = array<i64: 1, 128>}, {transform_indices = @transform_4, window_bounds = array<i64: 1, 1, 1>}]} {
    %c0_i32 = arith.constant 0 : i32
    %0 = arith.cmpi eq, %arg1, %c0_i32 : i32
    %1 = arith.extui %0 : i1 to i32
    %c0_i32_0 = arith.constant 0 : i32
    %2 = arith.cmpi ne, %1, %c0_i32_0 : i32
    scf.if %2 {
      %cst_25 = arith.constant 0.000000e+00 : f32
      %68 = vector.broadcast %cst_25 : f32 to vector<8x1xf32>
      %c0_26 = arith.constant 0 : index
      %c0_27 = arith.constant 0 : index
      %69 = vector.load %arg7[%c0_26, %c0_27] : memref<8x1xf32, #tpu.memory_space<vmem>>, vector<8x1xf32>
      tpu.vector_store %arg7[%c0_26, %c0_27], %68 {strides = array<i32>} : memref<8x1xf32, #tpu.memory_space<vmem>>, vector<8x1xf32>,
    } else {
    }
    %c0 = arith.constant 0 : index
    %c0_1 = arith.constant 0 : index
    %3 = vector.load %arg2[%c0, %c0_1] : memref<16x48xbf16, #tpu.memory_space<vmem>>, vector<16x48xbf16>
    %c0_2 = arith.constant 0 : index
    %c0_3 = arith.constant 0 : index
    %4 = vector.load %arg4[%c0_2, %c0_3] : memref<48x128xbf16, #tpu.memory_space<vmem>>, vector<48x128xbf16>
    %cst = arith.constant dense<0.000000e+00> : vector<16x128xf32>
    %5 = tpu.matmul %3, %4, %cst {dimension_numbers = #tpu.dot_dimension_numbers<[1], [0], [0], [1], [0, 0, 1, 1], [], []>} : vector<16x48xbf16>, vector<48x128xbf16>, vector<16x128xf32> -> vector<16x128xf32>
    %6 = vector.extract_strided_slice %5 {offsets = [0, 0], sizes = [8, 128], strides = [1, 1]} : vector<16x128xf32> to vector<8x128xf32>
    %7 = vector.extract_strided_slice %5 {offsets = [8, 0], sizes = [8, 128], strides = [1, 1]} : vector<16x128xf32> to vector<8x128xf32>
    %c0_4 = arith.constant 0 : index
    %c0_5 = arith.constant 0 : index
    %8 = vector.load %arg3[%c0_4, %c0_5] : memref<8x1xf32, #tpu.memory_space<vmem>>, vector<8x1xf32>
    %c0_6 = arith.constant 0 : index
    %c0_7 = arith.constant 0 : index
    %9 = vector.load %arg5[%c0_6, %c0_7] : memref<1x128xf32, #tpu.memory_space<vmem>>, vector<1x128xf32>
    %10 = vector.broadcast %8 : vector<8x1xf32> to vector<8x128xf32>
    %11 = vector.broadcast %9 : vector<1x128xf32> to vector<8x128xf32>
    %12 = arith.mulf %10, %11 : vector<8x128xf32>
    %cst_8 = arith.constant 9.99999974E-6 : f32
    %13 = vector.broadcast %cst_8 : f32 to vector<8x128xf32>
    %14 = arith.addf %12, %13 : vector<8x128xf32>
    %15 = arith.divf %7, %14 : vector<8x128xf32>
    %cst_9 = arith.constant 9.900000e-01 : f32
    %16 = vector.broadcast %cst_9 : f32 to vector<8x128xf32>
    %17 = arith.cmpf ogt, %15, %16 : vector<8x128xf32>
    %18 = arith.extui %17 : vector<8x128xi1> to vector<8x128xi32>
    %19 = arith.sitofp %18 : vector<8x128xi32> to vector<8x128xf32>
    %cst_10 = arith.constant 0.00999999977 : f32
    %20 = vector.broadcast %cst_10 : f32 to vector<8x128xf32>
    %21 = arith.cmpf olt, %15, %20 : vector<8x128xf32>
    %22 = arith.extui %21 : vector<8x128xi1> to vector<8x128xi32>
    %23 = arith.sitofp %22 : vector<8x128xi32> to vector<8x128xf32>
    %24 = arith.addf %19, %23 : vector<8x128xf32>
    %25 = math.absf %6 : vector<8x128xf32>
    %cst_11 = arith.constant 0.000000e+00 : f32
    %26 = vector.broadcast %cst_11 : f32 to vector<8x128xf32>
    %27 = arith.subf %26, %25 : vector<8x128xf32>
    %28 = math.exp %27 : vector<8x128xf32>
    %29 = math.log1p %28 : vector<8x128xf32>
    %cst_12 = arith.constant 0.000000e+00 : f32
    %30 = vector.broadcast %cst_12 : f32 to vector<8x128xf32>
    %31 = arith.maximumf %6, %30 : vector<8x128xf32>
    %32 = arith.addf %29, %31 : vector<8x128xf32>
    %33 = arith.mulf %15, %6 : vector<8x128xf32>
    %34 = arith.subf %32, %33 : vector<8x128xf32>
    %cst_13 = arith.constant 3.200000e+01 : f32
    %35 = vector.broadcast %cst_13 : f32 to vector<8x128xf32>
    %36 = arith.addf %6, %35 : vector<8x128xf32>
    %cst_14 = arith.constant 6.400000e+01 : f32
    %37 = vector.broadcast %cst_14 : f32 to vector<8x128xf32>
    %38 = arith.mulf %37, %15 : vector<8x128xf32>
    %39 = arith.subf %36, %38 : vector<8x128xf32>
    %40 = arith.mulf %39, %39 : vector<8x128xf32>
    %41 = arith.mulf %24, %34 : vector<8x128xf32>
    %cst_15 = arith.constant 1.000000e+00 : f32
    %42 = vector.broadcast %cst_15 : f32 to vector<8x128xf32>
    %43 = arith.subf %42, %24 : vector<8x128xf32>
    %cst_16 = arith.constant 1.000000e-01 : f32
    %44 = vector.broadcast %cst_16 : f32 to vector<8x128xf32>
    %45 = arith.mulf %44, %43 : vector<8x128xf32>
    %46 = arith.mulf %45, %40 : vector<8x128xf32>
    %47 = arith.addf %41, %46 : vector<8x128xf32>
    %c1_i32 = arith.constant 1 : i32
    %48 = arith.muli %arg0, %c1_i32 : i32
    %49 = arith.addi %48, %arg1 : i32
    %c128_i32 = arith.constant 128 : i32
    %50 = arith.muli %49, %c128_i32 : i32
    %51 = tpu.iota {dimensions = array<i32: 1>} : vector<1x128xi32>
    %52 = vector.broadcast %50 : i32 to vector<1x128xi32>
    %53 = arith.addi %52, %51 : vector<1x128xi32>
    %c64_i32 = arith.constant 64 : i32
    %54 = vector.broadcast %c64_i32 : i32 to vector<1x128xi32>
    %55 = arith.cmpi slt, %53, %54 : vector<1x128xi32>
    %cst_17 = arith.constant 0.000000e+00 : f32
    %56 = vector.shape_cast %55 : vector<1x128xi1> to vector<1x128xi1>
    %57 = vector.broadcast %56 : vector<1x128xi1> to vector<8x128xi1>
    %58 = vector.broadcast %cst_17 : f32 to vector<8x128xf32>
    %59 = arith.select %57, %47, %58 : vector<8x128xi1>, vector<8x128xf32>
    %c0_18 = arith.constant 0 : index
    %c0_19 = arith.constant 0 : index
    %60 = vector.load %arg7[%c0_18, %c0_19] : memref<8x1xf32, #tpu.memory_space<vmem>>, vector<8x1xf32>
    %cst_20 = arith.constant dense<0.000000e+00> : vector<8xf32>
    %61 = vector.multi_reduction <add>, %59, %cst_20 [1] : vector<8x128xf32> to vector<8xf32>
    %62 = vector.shape_cast %61 : vector<8xf32> to vector<8x1xf32>
    %63 = arith.addf %60, %62 : vector<8x1xf32>
    %c0_21 = arith.constant 0 : index
    %c0_22 = arith.constant 0 : index
    %64 = vector.load %arg7[%c0_21, %c0_22] : memref<8x1xf32, #tpu.memory_space<vmem>>, vector<8x1xf32>
    tpu.vector_store %arg7[%c0_21, %c0_22], %63 {strides = array<i32>} : memref<8x1xf32, #tpu.memory_space<vmem>>, vector<8x1xf32>,
    %c0_i32_23 = arith.constant 0 : i32
    %65 = arith.cmpi eq, %arg1, %c0_i32_23 : i32
    %66 = arith.extui %65 : i1 to i32
    %c0_i32_24 = arith.constant 0 : i32
    %67 = arith.cmpi ne, %66, %c0_i32_24 : i32
    scf.if %67 {
      %c0_25 = arith.constant 0 : index
      %c0_26 = arith.constant 0 : index
      %68 = vector.load %arg7[%c0_25, %c0_26] : memref<8x1xf32, #tpu.memory_space<vmem>>, vector<8x1xf32>
      %69 = vector.shape_cast %68 : vector<8x1xf32> to vector<1x8x1xf32>
      %cst_27 = arith.constant dense<0.000000e+00> : vector<1xf32>
      %70 = vector.multi_reduction <add>, %69, %cst_27 [1, 2] : vector<1x8x1xf32> to vector<1xf32>
      %71 = vector.shape_cast %70 : vector<1xf32> to vector<1x1x1xf32>
      %72 = vector.extract %71[0, 0, 0] : f32 from vector<1x1x1xf32>
      %73 = vector.broadcast %72 : f32 to vector<1x1x1xf32>
      %c0_28 = arith.constant 0 : index
      %c0_29 = arith.constant 0 : index
      %c0_30 = arith.constant 0 : index
      %74 = vector.load %arg6[%c0_28, %c0_29, %c0_30] : memref<1x1x1xf32, #tpu.memory_space<vmem>>, vector<1x1x1xf32>
      tpu.vector_store %arg6[%c0_28, %c0_29, %c0_30], %73 {strides = array<i32>} : memref<1x1x1xf32, #tpu.memory_space<vmem>>, vector<1x1x1xf32>,
    } else {
    }
    return
  }
  func.func @transform_0(%arg0: i32, %arg1: i32) -> (i32, i32) {
    %c0_i32 = arith.constant 0 : i32
    %c0_i32_0 = arith.constant 0 : i32
    %c0_i32_1 = arith.constant 0 : i32
    return %c0_i32, %c0_i32_0 : i32, i32
  }
  func.func @transform_1(%arg0: i32, %arg1: i32) -> (i32, i32) {
    %c0_i32 = arith.constant 0 : i32
    %c0_i32_0 = arith.constant 0 : i32
    %c0_i32_1 = arith.constant 0 : i32
    return %c0_i32, %c0_i32_0 : i32, i32
  }
  func.func @transform_2(%arg0: i32, %arg1: i32) -> (i32, i32) {
    %c1_i32 = arith.constant 1 : i32
    %0 = arith.muli %arg0, %c1_i32 : i32
    %1 = arith.addi %0, %arg1 : i32
    %c0_i32 = arith.constant 0 : i32
    %c0_i32_0 = arith.constant 0 : i32
    return %c0_i32, %1 : i32, i32
  }
  func.func @transform_3(%arg0: i32, %arg1: i32) -> (i32, i32) {
    %c1_i32 = arith.constant 1 : i32
    %0 = arith.muli %arg0, %c1_i32 : i32
    %1 = arith.addi %0, %arg1 : i32
    %c0_i32 = arith.constant 0 : i32
    %c0_i32_0 = arith.constant 0 : i32
    return %c0_i32, %1 : i32, i32
  }
  func.func @transform_4(%arg0: i32, %arg1: i32) -> (i32, i32, i32) {
    %c0_i32 = arith.constant 0 : i32
    %c0_i32_0 = arith.constant 0 : i32
    %c0_i32_1 = arith.constant 0 : i32
    return %arg0, %c0_i32, %c0_i32_0 : i32, i32, i32
  }
}

</mosaic_0001>

<llo_original>
// kernel: _idhn_forward.1
$region0: #{_idhn_forward.1}
  #allocation0 [shape = 'u32[]', space=smem, size = 0x4, offset = 0x4, fixed_abs, tag = 'smem constant byte address 0x4 - core index']
  #allocation1 [shape = 'u32[144,128]{1,0:T(1,128)}', space=vmem, size = 0x12000, scoped, tag = 'internal scratch']
  #allocation2 [shape = 'f32[8,1]{1,0:T(8,128)}', space=vmem, size = 0x1000, scoped, tag = 'scratch operand']
  %s0 = inlined_call_operand.vmem [shape: bf16[16,48], index: 0, kind: input, shape index: {}]
  %s1 = inlined_call_operand.vmem [shape: f32[8,1], index: 1, kind: input, shape index: {}]
  %s2 = inlined_call_operand.vmem [shape: bf16[48,128], index: 2, kind: input, shape index: {}]
  %s3 = inlined_call_operand.vmem [shape: f32[1,128], index: 3, kind: input, shape index: {}]
  %s4 = inlined_call_operand.hbm [shape: f32[1,1,1], index: 4, kind: output, shape index: {}]
  %s5 = sld [smem:[#allocation0]]
  $region34: #{_idhn_forward.1} parent=0
    _
  %s7 = ssub.s32 1, %s5
  %s8 = scalar_select 0, %s7, %s5
  $region1: #{_idhn_forward.1} parent=0
    #allocation3 [shape = 'u8[512]{0}', space=vmem, size = 0x400, scoped, tag = 'output window, operand 0, single buffered']
    #allocation4 [shape = 's32[1]{0}', space=sflag, size = 0x4, scoped, tag = 'scoped memory for _idhn_forward.1']
    %9 = vsyncpa [#allocation4], 0
    // Predicated region
    $region2: #{_idhn_forward.1} parent=1 // pred_check
      _
    $region3: #{_idhn_forward.1} parent=1 // pred_check_branch
      %11 = sbr.rel (0) target = $region5
    $region4: #{_idhn_forward.1} parent=1 // pred_region
      _
    $region5: #{_idhn_forward.1} parent=1 // pred_fallthru
      _
    // Predicated region
    $region6: #{_idhn_forward.1} parent=1 // pred_check
      _
    $region7: #{_idhn_forward.1} parent=1 // pred_check_branch
      %13 = sbr.rel (0) target = $region9
    $region8: #{_idhn_forward.1} parent=1 // pred_region
      _
    $region9: #{_idhn_forward.1} parent=1 // pred_fallthru
      _
    // Predicated region
    $region10: #{_idhn_forward.1} parent=1 // pred_check
      _
    $region11: #{_idhn_forward.1} parent=1 // pred_check_branch
      %15 = sbr.rel (0) target = $region13
    $region12: #{_idhn_forward.1} parent=1 // pred_region
      %s16 = sadd.s32 0, 0
      %p17 = scmp.lt.s32.totalorder %s16, 0
      %s18 = scalar_select %p17, %s16, 0
      %s19 = smul.addr %s18, 4
      %s20 = scalar_lea.vmem %s2, %s19
      %s21 = sadd.s32 0, 0
    $region13: #{_idhn_forward.1} parent=1 // pred_fallthru
      _
    // Predicated region
    $region14: #{_idhn_forward.1} parent=1 // pred_check
      _
    $region15: #{_idhn_forward.1} parent=1 // pred_check_branch
      %23 = sbr.rel (0) target = $region17
    $region16: #{_idhn_forward.1} parent=1 // pred_region
      %s24 = sadd.s32 0, 0
      %p25 = scmp.lt.s32.totalorder %s24, 0
      %s26 = scalar_select %p25, %s24, 0
      %s27 = scalar_lea.vmem %s3, %s26
      %s28 = sadd.s32 0, 0
    $region17: #{_idhn_forward.1} parent=1 // pred_fallthru
      _
    %s29 = sadd.s32 0, 0
    %p30 = scmp.lt.s32.totalorder %s29, 0
    %s31 = scalar_select %p30, %s29, 0
    %s32 = smul.addr %s31, 4
    %s33 = scalar_lea.vmem %s2, %s32
    %s34 = sadd.s32 0, 0
    %p35 = scmp.lt.s32.totalorder %s34, 0
    %s36 = scalar_select %p35, %s34, 0
    %s37 = scalar_lea.vmem %s3, %s36
    %s38 = sadd.s32 0, 0
    %p39 = scmp.lt.s32.totalorder %s38, 0
    %s40 = scalar_select %p39, %s38, 0
    %s41 = smul.addr %s40, 4
    %s42 = scalar_lea.vmem %s2, %s41
    %s43 = sadd.s32 0, 0
    %s44 = sadd.s32 0, 0
    %p45 = scmp.lt.s32.totalorder %s44, 0
    %s46 = scalar_select %p45, %s44, 0
    %s47 = scalar_lea.vmem %s3, %s46
    %s48 = sadd.s32 0, 0
    %p50 = scmp.eq.s32.totalorder 0, 0
    // Predicated region
    $region18: #{_idhn_forward.1} parent=1 // pred_check
      %p51 = pneg %p50
    $region19: #{_idhn_forward.1} parent=1 // pred_check_branch
      %53 = sbr.rel (%p51) target = $region21
    $region20: #{_idhn_forward.1} parent=1 // pred_region
      %vm54 = vcmask 7168
      %55 = vst.msk [vmem:[#allocation2] sm:$0xff] %vm54, 0.0
    $region21: #{_idhn_forward.1} parent=1 // pred_fallthru
      _
    %v56 = vld [vmem:[%s0] sm:$0xf]
    %v57 = vld [vmem:[%s0 + $0x4] sm:$0xf]
    %v58 = vld [vmem:[%s42] sm:$0xf]
    %v59 = vld [vmem:[%s42 + $0x4] sm:$0xf]
    %v60 = vld [vmem:[%s42 + $0x8] sm:$0xf]
    %v61 = vld [vmem:[%s42 + $0xc] sm:$0xf]
    %v62 = vld [vmem:[%s42 + $0x10] sm:$0xf]
    %v63 = vld [vmem:[%s42 + $0x14] sm:$0xf]
    %v66 = vunpack.c.l.b16 %v56
    %v67 = vunpack.c.l.b16 %v57
    %v68 = vpack.c.b16 %v67, %v66
    %v75 = vunpack.c.l.b16 %v58
    %v76 = vunpack.c.l.b16 %v59
    %v77 = vunpack.c.l.b16 %v60
    %v78 = vunpack.c.l.b16 %v61
    %v79 = vunpack.c.l.b16 %v62
    %v80 = vunpack.c.l.b16 %v63
    %v81 = vpack.c.b16 %v76, %v75
    %v82 = vpack.c.b16 %v78, %v77
    %v83 = vpack.c.b16 %v80, %v79
    %vm87 = vcmask 392192
    %v89 = vsel %vm87, %v68, 0
    %91 = vmatprep.subr.bf16.mxu0 0
    %92 = vmatpush1.bf16.msra.mxu0 0
    %93 = vmatprep.subr.bf16.mxu0 0
    %94 = vmatpush1.bf16.msra.mxu0 0
    %95 = vmatprep.subr.bf16.mxu0 0
    %96 = vmatpush1.bf16.msra.mxu0 0
    %97 = vmatprep.subr.bf16.mxu0 0
    %98 = vmatpush1.bf16.msra.mxu0 0
    %99 = vmatprep.subr.bf16.mxu0 0
    %100 = vmatpush1.bf16.msra.mxu0 0
    %101 = vmatprep.subr.bf16.mxu0 0
    %102 = vmatpush1.bf16.msra.mxu0 %v83
    %103 = vmatprep.subr.bf16.mxu0 0
    %104 = vmatpush1.bf16.msra.mxu0 %v82
    %105 = vmatprep.subr.bf16.mxu0 0
    %106 = vmatpush1.bf16.msra.mxu0 %v81
    %107 = vmatprep.subr.bf16.mxu0 0
    %108 = vmatpush2.bf16.msra.mxu0 0
    %109 = vmatprep.subr.bf16.mxu0 0
    %110 = vmatpush2.bf16.msra.mxu0 0
    %111 = vmatprep.subr.bf16.mxu0 0
    %112 = vmatpush2.bf16.msra.mxu0 0
    %113 = vmatprep.subr.bf16.mxu0 0
    %114 = vmatpush2.bf16.msra.mxu0 0
    %115 = vmatprep.subr.bf16.mxu0 0
    %116 = vmatpush2.bf16.msra.mxu0 0
    %117 = vmatprep.subr.bf16.mxu0 0
    %118 = vmatpush2.bf16.msra.mxu0 0
    %119 = vmatprep.subr.bf16.mxu0 0
    %120 = vmatpush2.bf16.msra.mxu0 0
    %121 = vmatprep.subr.bf16.mxu0 0
    %122 = vmatpush2.bf16.msra.mxu0 0
    %123 = vmatprep.mubr.bf16.mxu0 0
    %124 = vmatmul.mubr.bf16.gmra.mxu0 %v89
    %v125 = vpop.f32.mrf.mxu0
    %v126 = vadd.f32 0.0, %v125
    %v127 = vpop.f32.mrf.mxu0
    %v128 = vpop.f32.mrf.mxu0
    %v129 = vadd.f32 0.0, %v128
    %v130 = vpop.f32.mrf.mxu0
    %131 = vdwg.mxu0
    %v132 = vld [vmem:[%s1] sm:$0xff]
    %v133 = vld [vmem:[%s47] sm:$0x1]
    %135 = vset.pattern.permute.xlu0 0
    %136 = vperm.xlu0 %135, %v132
    %v137 = vpop.permute.xlu0 %136
    %v140 = vlaneseq
    %v141 = vshrl.u32 %v140, 7
    %v142 = vsub.s32 0, %v141
    %v143 = vrot.slane %v133, %v142
    %v145 = vmul.f32 %v137, %v143
    %v146 = vadd.f32 %v145, 1e-05
    %v147 = vrcp.pop %v146
    %v148 = vmul.f32 %v129, %v147
    %vm149 = vcmp.gt.f32.partialorder %v148, 0.99
    %v150 = vsel %vm149, 1, 0
    %v151 = vcvt.s32.f32 %v150
    %vm152 = vcmp.lt.f32.partialorder %v148, 0.01
    %v153 = vsel %vm152, 1, 0
    %v154 = vcvt.s32.f32 %v153
    %v155 = vadd.f32 %v151, %v154
    %v156 = vand.u32 2147483647, %v126
    %v157 = vsub.f32 0.0, %v156
    %v158 = vmul.f32 %v157, 1.442695
    %v159 = vpow.pop %v158
    %v160 = vadd.f32 %v159, 1.0
    %v161 = vlog2.pop %v160
    %v162 = vmul.f32 %v161, 0.6931472
    %v163 = vmul.f32 -0.5, %v159
    %v164 = vadd.f32 %v163, 1.0
    %v165 = vmul.f32 %v164, %v159
    %v166 = vand.u32 2147483647, %v159
    %vm167 = vcmp.lt.f32.partialorder %v166, 0.0004427343
    %v168 = vsel %vm167, %v165, %v162
    %v169 = vmax.f32 %v126, 0.0
    %v170 = vadd.f32 %v168, %v169
    %v171 = vmul.f32 %v148, %v126
    %v172 = vsub.f32 %v170, %v171
    %v173 = vadd.f32 %v126, 32.0
    %v174 = vmul.f32 %v148, 64.0
    %v175 = vsub.f32 %v173, %v174
    %v176 = vmul.f32 %v175, %v175
    %v177 = vmul.f32 %v155, %v172
    %v178 = vsub.f32 1.0, %v155
    %v179 = vmul.f32 %v178, 0.1
    %v180 = vmul.f32 %v179, %v176
    %v181 = vadd.f32 %v177, %v180
    %s182 = sadd.s32 0, 0
    %s183 = smul.u32 %s182, 128
    %v184 = vlaneseq
    %v185 = vand.u32 %v184, 127
    %v186 = vstv %s183
    %v187 = vadd.s32 %v186, %v185
    %vm188 = vcmp.lt.s32.totalorder %v187, 64
    %v189 = vsel %vm188, 1, 0
    %vm190 = vcmp.eq.s32.totalorder %v189, 1
    %v191 = vsel %vm190, %v181, 0.0
    %v192 = vld [vmem:[#allocation2] sm:$0xff]
    %193 = vadd.xlane.f32.xlu0 %v191
    %v194 = vpop.xlane.xlu0 %193
    %v195 = vadd.f32 %v192, %v194
    %vm196 = vcmask 7168
    %197 = vst.msk [vmem:[#allocation2] sm:$0xff] %vm196, %v195
    // Predicated region
    $region22: #{_idhn_forward.1} parent=1 // pred_check
      %p198 = pneg %p50
    $region23: #{_idhn_forward.1} parent=1 // pred_check_branch
      %200 = sbr.rel (%p198) target = $region25
    $region24: #{_idhn_forward.1} parent=1 // pred_region
      %v201 = vld [vmem:[#allocation2] sm:$0xff]
      %v202 = vsel %vm196, %v201, 0.0
      %203 = vadd.xlane.f32.xlu0 %v202
      %v204 = vpop.xlane.xlu0 %203
      %v205 = vrot.slane %v204, 4
      %v206 = vadd.f32 %v204, %v205
      %v207 = vrot.slane %v206, 2
      %v208 = vadd.f32 %v206, %v207
      %v209 = vrot.slane %v208, 1
      %v210 = vadd.f32 %v208, %v209
      %s211 = vtos %v210
      %v212 = vstv %s211
      %vm213 = vcmask 0
      %214 = vst.msk [vmem:[#allocation3] sm:$0x1] %vm213, %v212
    $region25: #{_idhn_forward.1} parent=1 // pred_fallthru
      _
    // Predicated region
    $region26: #{_idhn_forward.1} parent=1 // pred_check
      _
    $region27: #{_idhn_forward.1} parent=1 // pred_check_branch
      %216 = sbr.rel (0) target = $region29
    $region28: #{_idhn_forward.1} parent=1 // pred_region
      %s218 = ssub.s32 16, 16
      %219 = vsyncadd [#allocation4], %s218
      %s221 = sshll.u32 [#allocation3], 4
      %s222 = int_to_ptr.vmem [resolvable:$true] %s221
      %224 = dma.vmem_to_hbm [thread:$0]  %s222, 16, %s4, [#allocation4]
    $region29: #{_idhn_forward.1} parent=1 // pred_fallthru
      _
    // Predicated region
    $region30: #{_idhn_forward.1} parent=1 // pred_check
      _
    $region31: #{_idhn_forward.1} parent=1 // pred_check_branch
      %226 = sbr.rel (0) target = $region33
    $region32: #{_idhn_forward.1} parent=1 // pred_region
      %227 = dma.done [#allocation4], 16
    $region33: #{_idhn_forward.1} parent=1 // pred_fallthru
      _
    %228 = vsyncpa [#allocation4], 1

</llo_original>
